<compile_context>
chip_gen: v7x
topology: tpu7x:2x2x1
jax: 0.10.0
libtpu: 0.0.40
codegen_flags: <defaults>
</compile_context>

<pallas_src>
import functools

import jax
import jax.numpy as jnp
from jax.experimental import pallas as pl
from jax.experimental.pallas import tpu as pltpu


def _round_up(x, m):
    return -(-x // m) * m


def _decoder_kernel(x_ref, h0_ref, c0_ref, o0_ref,
                    w_x_ref, w_op_ref, w_h_ref, b_ref,
                    w_o_ref, w_out_ref,
                    logp_ref, state_ref,
                    h_sc, c_sc, o_sc,
                    *, hidden_size, output_size):
    H = hidden_size
    O = output_size
    t = pl.program_id(0)

    # Step 0: load the initial recurrent state into the VMEM-resident carry.
    @pl.when(t == 0)
    def _():
        h_sc[...] = h0_ref[...]
        c_sc[...] = c0_ref[...]
        o_sc[...] = o0_ref[...]

    mm = w_x_ref.dtype
    hp = h_sc[...]                      # (B, H) f32 carried state
    cp = c_sc[...]
    op = o_sc[...]

    # LSTM gates: three accumulating MXU pushes against VMEM-resident weight
    # blocks, f32 accumulation, bias added in f32 post-matmul.
    gates = (jnp.dot(x_ref[...].astype(mm), w_x_ref[...],
                     preferred_element_type=jnp.float32)
             + jnp.dot(op.astype(mm), w_op_ref[...],
                       preferred_element_type=jnp.float32)
             + jnp.dot(hp.astype(mm), w_h_ref[...],
                       preferred_element_type=jnp.float32)
             + b_ref[...])                                    # (B, 4H) f32

    # PyTorch gate order i, f, g, o. One full-tile sigmoid (covers i/f/o);
    # tanh only on the g quadrant (EUP is a single-unit FIFO).
    sig = jax.nn.sigmoid(gates)
    i_g = sig[:, 0 * H:1 * H]
    f_g = sig[:, 1 * H:2 * H]
    o_g = sig[:, 3 * H:4 * H]
    g_g = jnp.tanh(gates[:, 2 * H:3 * H])

    cn = f_g * cp + i_g * g_g                                 # f32 elementwise
    hn = o_g * jnp.tanh(cn)

    # on = tanh(Linear(2H->H, no bias)(cat([h, h]))) == tanh(h @ (Wo1 + Wo2)^T)
    on = jnp.tanh(jnp.dot(hn.astype(mm), w_o_ref[...],
                          preferred_element_type=jnp.float32))

    # output = log_softmax(Linear(H->O, no bias)(on), dim=1)
    logits = jnp.dot(on.astype(mm), w_out_ref[...],
                     preferred_element_type=jnp.float32)      # (B, O) f32
    m = jnp.max(logits, axis=1, keepdims=True)
    lse = jnp.log(jnp.sum(jnp.exp(logits - m), axis=1, keepdims=True)) + m
    lp = logits - lse

    # Lane-dense per-step store: pad to a multiple of 128 lanes and write the
    # full tile in one unmasked store (padding sliced off in the wrapper).
    B = lp.shape[0]
    P = logp_ref.shape[-1]
    if P > O:
        lp = jnp.concatenate([lp, jnp.zeros((B, P - O), jnp.float32)], axis=1)
    logp_ref[...] = lp

    # Carry state to the next timestep — stays in VMEM, no HBM round-trip.
    h_sc[...] = hn
    c_sc[...] = cn
    o_sc[...] = on

    # Final state written once as a single lane-padded slab [hn | cn | on | 0].
    @pl.when(t == pl.num_programs(0) - 1)
    def _():
        S = state_ref.shape[-1]
        parts = [hn, cn, on]
        if S > 3 * H:
            parts.append(jnp.zeros((B, S - 3 * H), jnp.float32))
        state_ref[...] = jnp.concatenate(parts, axis=1)


def decoder_rnn_decode(params, x_seq, h0, c0, o0):
    """Run T decoder steps inside ONE pallas_call.

    x_seq: (T, B, I) f32 time-major per-step inputs.
    h0, c0, o0: (B, H) f32 initial recurrent state.
    Returns (log_probs (T, B, O), hn (B, H), cn (B, H), on (B, H)).
    """
    T, B, I = x_seq.shape
    H = h0.shape[-1]
    G = 4 * H
    O = params["w_out"].shape[-1]
    P = _round_up(O, 128)        # lane-dense per-step output width
    S = _round_up(3 * H, 128)    # lane-dense final-state width

    def const(shape):
        return pl.BlockSpec(shape, lambda t: tuple(0 for _ in shape))

    kernel = functools.partial(_decoder_kernel, hidden_size=H, output_size=O)

    logp, state = pl.pallas_call(
        kernel,
        out_shape=(jax.ShapeDtypeStruct((T, B, P), jnp.float32),
                   jax.ShapeDtypeStruct((B, S), jnp.float32)),
        grid_spec=pltpu.PrefetchScalarGridSpec(
            num_scalar_prefetch=0,
            grid=(T,),
            in_specs=[
                pl.BlockSpec((None, B, I), lambda t: (t, 0, 0)),  # x_t per step
                const((B, H)), const((B, H)), const((B, H)),      # h0, c0, o0
                const((I, G)), const((H, G)), const((H, G)),      # w_x, w_op, w_h
                const((1, G)),                                     # bias (f32)
                const((H, H)), const((H, O)),                      # w_o_sum, w_out
            ],
            out_specs=(
                pl.BlockSpec((None, B, P), lambda t: (t, 0, 0)),   # per-step log_probs
                const((B, S)),                                      # final [hn|cn|on|pad]
            ),
            scratch_shapes=[pltpu.VMEM((B, H), jnp.float32),        # h carry
                            pltpu.VMEM((B, H), jnp.float32),        # c carry
                            pltpu.VMEM((B, H), jnp.float32)],       # o carry
        ),
        compiler_params=pltpu.CompilerParams(
            dimension_semantics=("arbitrary",)),   # T is a true recurrence
    )(x_seq, h0, c0, o0,
      params["w_x"], params["w_op"], params["w_h"], params["b"],
      params["w_o_sum"], params["w_out"])

    log_probs = logp[:, :, :O]
    hn = state[:, 0 * H:1 * H]
    cn = state[:, 1 * H:2 * H]
    on = state[:, 2 * H:3 * H]
    return log_probs, hn, cn, on


def decoder_rnn_forward(params, x, hp, cp, op, encoder_outputs=None):
    """Module-parity single step: x (B,1,I), hp/cp (1,B,H), op (B,H)."""
    del encoder_outputs  # unused by the reference module's forward
    x_seq = jnp.transpose(x, (1, 0, 2))                 # (1, B, I) time-major
    log_probs, hn, cn, on = decoder_rnn_decode(params, x_seq, hp[0], cp[0], op)
    return log_probs[0], (hn[None], cn[None]), on


def init_params(key, input_size, hidden_size, output_size,
                matmul_dtype=jnp.bfloat16):
    """Deterministic init matching the torch module, pre-sliced for the kernel."""
    H, I, O = hidden_size, input_size, output_size
    ks = jax.random.split(key, 6)
    s = 1.0 / jnp.sqrt(H)
    # nn.LSTM: W_ih (4H, I+H), W_hh (4H, H), b_ih (4H,), b_hh (4H,)
    w_ih = jax.random.uniform(ks[0], (4 * H, I + H), jnp.float32, -s, s)
    w_hh = jax.random.uniform(ks[1], (4 * H, H), jnp.float32, -s, s)
    b_ih = jax.random.uniform(ks[2], (4 * H,), jnp.float32, -s, s)
    b_hh = jax.random.uniform(ks[3], (4 * H,), jnp.float32, -s, s)
    # self.o: Linear(2H -> H, bias=False); self.out: Linear(H -> O, bias=False)
    w_o = jax.random.uniform(ks[4], (H, 2 * H), jnp.float32, -s, s)
    w_out = jax.random.uniform(ks[5], (O, H), jnp.float32, -s, s)

    return {
        # lstm_input = cat([x, op]): W_ih cols [:I] hit x, [I:] hit op.
        "w_x": jnp.transpose(w_ih[:, :I]).astype(matmul_dtype),    # (I, 4H)
        "w_op": jnp.transpose(w_ih[:, I:]).astype(matmul_dtype),   # (H, 4H)
        "w_h": jnp.transpose(w_hh).astype(matmul_dtype),           # (H, 4H)
        "b": (b_ih + b_hh)[None, :],                               # (1, 4H) f32
        # o-layer input is literally cat([h, h]) -> exact pre-sum of halves.
        "w_o_sum": jnp.transpose(w_o[:, :H] + w_o[:, H:]).astype(matmul_dtype),
        "w_out": jnp.transpose(w_out).astype(matmul_dtype),        # (H, O)
    }


def _reference_step(params, x_t, hp, cp, op):
    """Plain-JAX single decoder step with identical matmul-dtype handling."""
    H = hp.shape[-1]
    mm = params["w_x"].dtype
    gates = (jnp.dot(x_t.astype(mm), params["w_x"],
                     preferred_element_type=jnp.float32)
             + jnp.dot(op.astype(mm), params["w_op"],
                       preferred_element_type=jnp.float32)
             + jnp.dot(hp.astype(mm), params["w_h"],
                       preferred_element_type=jnp.float32)
             + params["b"])
    i = jax.nn.sigmoid(gates[:, 0 * H:1 * H])
    f = jax.nn.sigmoid(gates[:, 1 * H:2 * H])
    g = jnp.tanh(gates[:, 2 * H:3 * H])
    o = jax.nn.sigmoid(gates[:, 3 * H:4 * H])
    cn = f * cp + i * g
    hn = o * jnp.tanh(cn)
    on = jnp.tanh(jnp.dot(hn.astype(mm), params["w_o_sum"],
                          preferred_element_type=jnp.float32))
    logits = jnp.dot(on.astype(mm), params["w_out"],
                     preferred_element_type=jnp.float32)
    return jax.nn.log_softmax(logits, axis=1), hn, cn, on


if __name__ == "__main__":
    B, I, H, O = 4, 16, 32, 24        # batch, input_size, hidden_size, output_size
    T_DEC = 6                         # decode steps for the in-kernel-loop check
    ENC_T, ENC_H = 8, 32              # encoder_outputs shape (unused by forward)

    key = jax.random.PRNGKey(0)
    kp, kx, kh, kc, ko, ke, kxs = jax.random.split(key, 7)
    params = init_params(kp, I, H, O)

    # --- module-parity single-step forward (T = 1) ---
    x = jax.random.normal(kx, (B, 1, I), jnp.float32)
    hp = jax.random.normal(kh, (1, B, H), jnp.float32)
    cp = jax.random.normal(kc, (1, B, H), jnp.float32)
    op = jax.random.normal(ko, (B, H), jnp.float32)
    encoder_outputs = jax.random.normal(ke, (B, ENC_T, ENC_H), jnp.float32)

    out, (hn, cn), on = decoder_rnn_forward(params, x, hp, cp, op, encoder_outputs)
    jax.block_until_ready((out, hn, cn, on))

    r_out, r_hn, r_cn, r_on = _reference_step(params, x[:, 0, :], hp[0], cp[0], op)
    assert jnp.allclose(out, r_out, atol=2e-3, rtol=2e-3), "output mismatch"
    assert jnp.allclose(hn[0], r_hn, atol=2e-3, rtol=2e-3), "hn mismatch"
    assert jnp.allclose(cn[0], r_cn, atol=2e-3, rtol=2e-3), "cn mismatch"
    assert jnp.allclose(on, r_on, atol=2e-3, rtol=2e-3), "on mismatch"

    # --- multi-step decode: whole recurrence inside ONE pallas_call ---
    x_seq = jax.random.normal(kxs, (T_DEC, B, I), jnp.float32)
    lp_seq, hn2, cn2, on2 = decoder_rnn_decode(params, x_seq, hp[0], cp[0], op)
    jax.block_until_ready((lp_seq, hn2, cn2, on2))

    h_r, c_r, o_r = hp[0], cp[0], op
    for t in range(T_DEC):
        lp_r, h_r, c_r, o_r = _reference_step(params, x_seq[t], h_r, c_r, o_r)
        assert jnp.allclose(lp_seq[t], lp_r, atol=2e-3, rtol=2e-3), f"step {t} mismatch"
    assert jnp.allclose(hn2, h_r, atol=2e-3, rtol=2e-3), "final hn mismatch"
    assert jnp.allclose(cn2, c_r, atol=2e-3, rtol=2e-3), "final cn mismatch"
    assert jnp.allclose(on2, o_r, atol=2e-3, rtol=2e-3), "final on mismatch"

    print("KERNEL_OK")
</pallas_src>

<mosaic_0001>
module attributes {stable_mosaic.version = 11 : i64} {
  func.func @_decoder_kernel(%arg0: i32, %arg1: memref<1x4x16xf32, #tpu.memory_space<vmem>>, %arg2: memref<4x32xf32, #tpu.memory_space<vmem>>, %arg3: memref<4x32xf32, #tpu.memory_space<vmem>>, %arg4: memref<4x32xf32, #tpu.memory_space<vmem>>, %arg5: memref<16x128xbf16, #tpu.memory_space<vmem>>, %arg6: memref<32x128xbf16, #tpu.memory_space<vmem>>, %arg7: memref<32x128xbf16, #tpu.memory_space<vmem>>, %arg8: memref<1x128xf32, #tpu.memory_space<vmem>>, %arg9: memref<32x32xbf16, #tpu.memory_space<vmem>>, %arg10: memref<32x24xbf16, #tpu.memory_space<vmem>>, %arg11: memref<1x4x128xf32, #tpu.memory_space<vmem>>, %arg12: memref<4x128xf32, #tpu.memory_space<vmem>>, %arg13: memref<4x32xf32, #tpu.memory_space<vmem>>, %arg14: memref<4x32xf32, #tpu.memory_space<vmem>>, %arg15: memref<4x32xf32, #tpu.memory_space<vmem>>) attributes {dimension_semantics = [#tpu.dimension_semantics<arbitrary>], iteration_bounds = array<i64: 1>, scalar_prefetch = 0 : i64, scratch_operands = 3 : i64, tpu.core_type = #tpu.core_type<tc>, window_params = [{transform_indices = @transform_0, window_bounds = array<i64: 1, 4, 16>}, {pipeline_mode = #tpu.pipeline_mode<synchronous>, transform_indices = @transform_1, window_bounds = array<i64: 4, 32>}, {pipeline_mode = #tpu.pipeline_mode<synchronous>, transform_indices = @transform_2, window_bounds = array<i64: 4, 32>}, {pipeline_mode = #tpu.pipeline_mode<synchronous>, transform_indices = @transform_3, window_bounds = array<i64: 4, 32>}, {pipeline_mode = #tpu.pipeline_mode<synchronous>, transform_indices = @transform_4, window_bounds = array<i64: 16, 128>}, {pipeline_mode = #tpu.pipeline_mode<synchronous>, transform_indices = @transform_5, window_bounds = array<i64: 32, 128>}, {pipeline_mode = #tpu.pipeline_mode<synchronous>, transform_indices = @transform_6, window_bounds = array<i64: 32, 128>}, {pipeline_mode = #tpu.pipeline_mode<synchronous>, transform_indices = @transform_7, window_bounds = array<i64: 1, 128>}, {pipeline_mode = #tpu.pipeline_mode<synchronous>, transform_indices = @transform_8, window_bounds = array<i64: 32, 32>}, {pipeline_mode = #tpu.pipeline_mode<synchronous>, transform_indices = @transform_9, window_bounds = array<i64: 32, 24>}, {transform_indices = @transform_10, window_bounds = array<i64: 1, 4, 128>}, {pipeline_mode = #tpu.pipeline_mode<synchronous>, transform_indices = @transform_11, window_bounds = array<i64: 4, 128>}]} {
    %c0_i32 = arith.constant 0 : i32
    %0 = arith.cmpi eq, %arg0, %c0_i32 : i32
    %1 = arith.extui %0 : i1 to i32
    %c0_i32_0 = arith.constant 0 : i32
    %2 = arith.cmpi ne, %1, %c0_i32_0 : i32
    scf.if %2 {
      %c0_40 = arith.constant 0 : index
      %c0_41 = arith.constant 0 : index
      %66 = vector.load %arg2[%c0_40, %c0_41] : memref<4x32xf32, #tpu.memory_space<vmem>>, vector<4x32xf32>
      %c0_42 = arith.constant 0 : index
      %c0_43 = arith.constant 0 : index
      %67 = vector.load %arg13[%c0_42, %c0_43] : memref<4x32xf32, #tpu.memory_space<vmem>>, vector<4x32xf32>
      tpu.vector_store %arg13[%c0_42, %c0_43], %66 {strides = array<i32>} : memref<4x32xf32, #tpu.memory_space<vmem>>, vector<4x32xf32>,
      %c0_44 = arith.constant 0 : index
      %c0_45 = arith.constant 0 : index
      %68 = vector.load %arg3[%c0_44, %c0_45] : memref<4x32xf32, #tpu.memory_space<vmem>>, vector<4x32xf32>
      %c0_46 = arith.constant 0 : index
      %c0_47 = arith.constant 0 : index
      %69 = vector.load %arg14[%c0_46, %c0_47] : memref<4x32xf32, #tpu.memory_space<vmem>>, vector<4x32xf32>
      tpu.vector_store %arg14[%c0_46, %c0_47], %68 {strides = array<i32>} : memref<4x32xf32, #tpu.memory_space<vmem>>, vector<4x32xf32>,
      %c0_48 = arith.constant 0 : index
      %c0_49 = arith.constant 0 : index
      %70 = vector.load %arg4[%c0_48, %c0_49] : memref<4x32xf32, #tpu.memory_space<vmem>>, vector<4x32xf32>
      %c0_50 = arith.constant 0 : index
      %c0_51 = arith.constant 0 : index
      %71 = vector.load %arg15[%c0_50, %c0_51] : memref<4x32xf32, #tpu.memory_space<vmem>>, vector<4x32xf32>
      tpu.vector_store %arg15[%c0_50, %c0_51], %70 {strides = array<i32>} : memref<4x32xf32, #tpu.memory_space<vmem>>, vector<4x32xf32>,
    } else {
    }
    %c0 = arith.constant 0 : index
    %c0_1 = arith.constant 0 : index
    %3 = vector.load %arg13[%c0, %c0_1] : memref<4x32xf32, #tpu.memory_space<vmem>>, vector<4x32xf32>
    %c0_2 = arith.constant 0 : index
    %c0_3 = arith.constant 0 : index
    %4 = vector.load %arg14[%c0_2, %c0_3] : memref<4x32xf32, #tpu.memory_space<vmem>>, vector<4x32xf32>
    %c0_4 = arith.constant 0 : index
    %c0_5 = arith.constant 0 : index
    %5 = vector.load %arg15[%c0_4, %c0_5] : memref<4x32xf32, #tpu.memory_space<vmem>>, vector<4x32xf32>
    %c0_6 = arith.constant 0 : index
    %c0_7 = arith.constant 0 : index
    %c0_8 = arith.constant 0 : index
    %6 = vector.load %arg1[%c0_6, %c0_7, %c0_8] : memref<1x4x16xf32, #tpu.memory_space<vmem>>, vector<1x4x16xf32>
    %7 = vector.shape_cast %6 : vector<1x4x16xf32> to vector<4x16xf32>
    %8 = arith.truncf %7 : vector<4x16xf32> to vector<4x16xbf16>
    %c0_9 = arith.constant 0 : index
    %c0_10 = arith.constant 0 : index
    %9 = vector.load %arg5[%c0_9, %c0_10] : memref<16x128xbf16, #tpu.memory_space<vmem>>, vector<16x128xbf16>
    %cst = arith.constant dense<0.000000e+00> : vector<4x128xf32>
    %10 = tpu.matmul %8, %9, %cst {dimension_numbers = #tpu.dot_dimension_numbers<[1], [0], [0], [1], [0, 0, 1, 1], [], []>} : vector<4x16xbf16>, vector<16x128xbf16>, vector<4x128xf32> -> vector<4x128xf32>
    %11 = arith.truncf %5 : vector<4x32xf32> to vector<4x32xbf16>
    %c0_11 = arith.constant 0 : index
    %c0_12 = arith.constant 0 : index
    %12 = vector.load %arg6[%c0_11, %c0_12] : memref<32x128xbf16, #tpu.memory_space<vmem>>, vector<32x128xbf16>
    %cst_13 = arith.constant dense<0.000000e+00> : vector<4x128xf32>
    %13 = tpu.matmul %11, %12, %cst_13 {dimension_numbers = #tpu.dot_dimension_numbers<[1], [0], [0], [1], [0, 0, 1, 1], [], []>} : vector<4x32xbf16>, vector<32x128xbf16>, vector<4x128xf32> -> vector<4x128xf32>
    %14 = arith.addf %10, %13 : vector<4x128xf32>
    %15 = arith.truncf %3 : vector<4x32xf32> to vector<4x32xbf16>
    %c0_14 = arith.constant 0 : index
    %c0_15 = arith.constant 0 : index
    %16 = vector.load %arg7[%c0_14, %c0_15] : memref<32x128xbf16, #tpu.memory_space<vmem>>, vector<32x128xbf16>
    %cst_16 = arith.constant dense<0.000000e+00> : vector<4x128xf32>
    %17 = tpu.matmul %15, %16, %cst_16 {dimension_numbers = #tpu.dot_dimension_numbers<[1], [0], [0], [1], [0, 0, 1, 1], [], []>} : vector<4x32xbf16>, vector<32x128xbf16>, vector<4x128xf32> -> vector<4x128xf32>
    %18 = arith.addf %14, %17 : vector<4x128xf32>
    %c0_17 = arith.constant 0 : index
    %c0_18 = arith.constant 0 : index
    %19 = vector.load %arg8[%c0_17, %c0_18] : memref<1x128xf32, #tpu.memory_space<vmem>>, vector<1x128xf32>
    %20 = vector.broadcast %19 : vector<1x128xf32> to vector<4x128xf32>
    %21 = arith.addf %18, %20 : vector<4x128xf32>
    %22 = arith.negf %21 : vector<4x128xf32>
    %23 = math.exp %22 : vector<4x128xf32>
    %cst_19 = arith.constant 1.000000e+00 : f32
    %24 = vector.broadcast %cst_19 : f32 to vector<4x128xf32>
    %25 = arith.addf %24, %23 : vector<4x128xf32>
    %26 = arith.divf %24, %25 : vector<4x128xf32>
    %27 = vector.extract_strided_slice %26 {offsets = [0, 0], sizes = [4, 32], strides = [1, 1]} : vector<4x128xf32> to vector<4x32xf32>
    %28 = vector.extract_strided_slice %26 {offsets = [0, 32], sizes = [4, 32], strides = [1, 1]} : vector<4x128xf32> to vector<4x32xf32>
    %29 = vector.extract_strided_slice %26 {offsets = [0, 96], sizes = [4, 32], strides = [1, 1]} : vector<4x128xf32> to vector<4x32xf32>
    %30 = vector.extract_strided_slice %21 {offsets = [0, 64], sizes = [4, 32], strides = [1, 1]} : vector<4x128xf32> to vector<4x32xf32>
    %31 = math.tanh %30 : vector<4x32xf32>
    %32 = arith.mulf %28, %4 : vector<4x32xf32>
    %33 = arith.mulf %27, %31 : vector<4x32xf32>
    %34 = arith.addf %32, %33 : vector<4x32xf32>
    %35 = math.tanh %34 : vector<4x32xf32>
    %36 = arith.mulf %29, %35 : vector<4x32xf32>
    %37 = arith.truncf %36 : vector<4x32xf32> to vector<4x32xbf16>
    %c0_20 = arith.constant 0 : index
    %c0_21 = arith.constant 0 : index
    %38 = vector.load %arg9[%c0_20, %c0_21] : memref<32x32xbf16, #tpu.memory_space<vmem>>, vector<32x32xbf16>
    %cst_22 = arith.constant dense<0.000000e+00> : vector<4x32xf32>
    %39 = tpu.matmul %37, %38, %cst_22 {dimension_numbers = #tpu.dot_dimension_numbers<[1], [0], [0], [1], [0, 0, 1, 1], [], []>} : vector<4x32xbf16>, vector<32x32xbf16>, vector<4x32xf32> -> vector<4x32xf32>
    %40 = math.tanh %39 : vector<4x32xf32>
    %41 = arith.truncf %40 : vector<4x32xf32> to vector<4x32xbf16>
    %c0_23 = arith.constant 0 : index
    %c0_24 = arith.constant 0 : index
    %42 = vector.load %arg10[%c0_23, %c0_24] : memref<32x24xbf16, #tpu.memory_space<vmem>>, vector<32x24xbf16>
    %cst_25 = arith.constant dense<0.000000e+00> : vector<4x24xf32>
    %43 = tpu.matmul %41, %42, %cst_25 {dimension_numbers = #tpu.dot_dimension_numbers<[1], [0], [0], [1], [0, 0, 1, 1], [], []>} : vector<4x32xbf16>, vector<32x24xbf16>, vector<4x24xf32> -> vector<4x24xf32>
    %cst_26 = arith.constant dense<0xFF800000> : vector<4xf32>
    %44 = vector.multi_reduction <maximumf>, %43, %cst_26 [1] : vector<4x24xf32> to vector<4xf32>
    %45 = vector.shape_cast %44 : vector<4xf32> to vector<4x1xf32>
    %46 = vector.broadcast %45 : vector<4x1xf32> to vector<4x24xf32>
    %47 = arith.subf %43, %46 : vector<4x24xf32>
    %48 = math.exp %47 : vector<4x24xf32>
    %cst_27 = arith.constant dense<0.000000e+00> : vector<4xf32>
    %49 = vector.multi_reduction <add>, %48, %cst_27 [1] : vector<4x24xf32> to vector<4xf32>
    %50 = vector.shape_cast %49 : vector<4xf32> to vector<4x1xf32>
    %51 = math.log %50 : vector<4x1xf32>
    %52 = arith.addf %51, %45 : vector<4x1xf32>
    %53 = vector.broadcast %52 : vector<4x1xf32> to vector<4x24xf32>
    %54 = arith.subf %43, %53 : vector<4x24xf32>
    %cst_28 = arith.constant 0.000000e+00 : f32
    %55 = vector.broadcast %cst_28 : f32 to vector<4x104xf32>
    %56 = tpu.concatenate %54, %55 in 1 : vector<4x24xf32>, vector<4x104xf32> -> vector<4x128xf32>
    %c0_29 = arith.constant 0 : index
    %c0_30 = arith.constant 0 : index
    %c0_31 = arith.constant 0 : index
    %57 = vector.load %arg11[%c0_29, %c0_30, %c0_31] : memref<1x4x128xf32, #tpu.memory_space<vmem>>, vector<1x4x128xf32>
    %58 = vector.shape_cast %57 : vector<1x4x128xf32> to vector<4x128xf32>
    %59 = vector.shape_cast %56 : vector<4x128xf32> to vector<1x4x128xf32>
    tpu.vector_store %arg11[%c0_29, %c0_30, %c0_31], %59 {strides = array<i32>} : memref<1x4x128xf32, #tpu.memory_space<vmem>>, vector<1x4x128xf32>,
    %c0_32 = arith.constant 0 : index
    %c0_33 = arith.constant 0 : index
    %60 = vector.load %arg13[%c0_32, %c0_33] : memref<4x32xf32, #tpu.memory_space<vmem>>, vector<4x32xf32>
    tpu.vector_store %arg13[%c0_32, %c0_33], %36 {strides = array<i32>} : memref<4x32xf32, #tpu.memory_space<vmem>>, vector<4x32xf32>,
    %c0_34 = arith.constant 0 : index
    %c0_35 = arith.constant 0 : index
    %61 = vector.load %arg14[%c0_34, %c0_35] : memref<4x32xf32, #tpu.memory_space<vmem>>, vector<4x32xf32>
    tpu.vector_store %arg14[%c0_34, %c0_35], %34 {strides = array<i32>} : memref<4x32xf32, #tpu.memory_space<vmem>>, vector<4x32xf32>,
    %c0_36 = arith.constant 0 : index
    %c0_37 = arith.constant 0 : index
    %62 = vector.load %arg15[%c0_36, %c0_37] : memref<4x32xf32, #tpu.memory_space<vmem>>, vector<4x32xf32>
    tpu.vector_store %arg15[%c0_36, %c0_37], %40 {strides = array<i32>} : memref<4x32xf32, #tpu.memory_space<vmem>>, vector<4x32xf32>,
    %c0_i32_38 = arith.constant 0 : i32
    %63 = arith.cmpi eq, %arg0, %c0_i32_38 : i32
    %64 = arith.extui %63 : i1 to i32
    %c0_i32_39 = arith.constant 0 : i32
    %65 = arith.cmpi ne, %64, %c0_i32_39 : i32
    scf.if %65 {
      %cst_40 = arith.constant 0.000000e+00 : f32
      %66 = vector.broadcast %cst_40 : f32 to vector<4x32xf32>
      %67 = tpu.concatenate %36, %34, %40, %66 in 1 : vector<4x32xf32>, vector<4x32xf32>, vector<4x32xf32>, vector<4x32xf32> -> vector<4x128xf32>
      %c0_41 = arith.constant 0 : index
      %c0_42 = arith.constant 0 : index
      %68 = vector.load %arg12[%c0_41, %c0_42] : memref<4x128xf32, #tpu.memory_space<vmem>>, vector<4x128xf32>
      tpu.vector_store %arg12[%c0_41, %c0_42], %67 {strides = array<i32>} : memref<4x128xf32, #tpu.memory_space<vmem>>, vector<4x128xf32>,
    } else {
    }
    return
  }
  func.func @transform_0(%arg0: i32) -> (i32, i32, i32) {
    %c0_i32 = arith.constant 0 : i32
    %c0_i32_0 = arith.constant 0 : i32
    %c0_i32_1 = arith.constant 0 : i32
    return %arg0, %c0_i32, %c0_i32_0 : i32, i32, i32
  }
  func.func @transform_1(%arg0: i32) -> (i32, i32) {
    %c0_i32 = arith.constant 0 : i32
    %c0_i32_0 = arith.constant 0 : i32
    %c0_i32_1 = arith.constant 0 : i32
    return %c0_i32, %c0_i32_0 : i32, i32
  }
  func.func @transform_2(%arg0: i32) -> (i32, i32) {
    %c0_i32 = arith.constant 0 : i32
    %c0_i32_0 = arith.constant 0 : i32
    %c0_i32_1 = arith.constant 0 : i32
    return %c0_i32, %c0_i32_0 : i32, i32
  }
  func.func @transform_3(%arg0: i32) -> (i32, i32) {
    %c0_i32 = arith.constant 0 : i32
    %c0_i32_0 = arith.constant 0 : i32
    %c0_i32_1 = arith.constant 0 : i32
    return %c0_i32, %c0_i32_0 : i32, i32
  }
  func.func @transform_4(%arg0: i32) -> (i32, i32) {
    %c0_i32 = arith.constant 0 : i32
    %c0_i32_0 = arith.constant 0 : i32
    %c0_i32_1 = arith.constant 0 : i32
    return %c0_i32, %c0_i32_0 : i32, i32
  }
  func.func @transform_5(%arg0: i32) -> (i32, i32) {
    %c0_i32 = arith.constant 0 : i32
    %c0_i32_0 = arith.constant 0 : i32
    %c0_i32_1 = arith.constant 0 : i32
    return %c0_i32, %c0_i32_0 : i32, i32
  }
  func.func @transform_6(%arg0: i32) -> (i32, i32) {
    %c0_i32 = arith.constant 0 : i32
    %c0_i32_0 = arith.constant 0 : i32
    %c0_i32_1 = arith.constant 0 : i32
    return %c0_i32, %c0_i32_0 : i32, i32
  }
  func.func @transform_7(%arg0: i32) -> (i32, i32) {
    %c0_i32 = arith.constant 0 : i32
    %c0_i32_0 = arith.constant 0 : i32
    %c0_i32_1 = arith.constant 0 : i32
    return %c0_i32, %c0_i32_0 : i32, i32
  }
  func.func @transform_8(%arg0: i32) -> (i32, i32) {
    %c0_i32 = arith.constant 0 : i32
    %c0_i32_0 = arith.constant 0 : i32
    %c0_i32_1 = arith.constant 0 : i32
    return %c0_i32, %c0_i32_0 : i32, i32
  }
  func.func @transform_9(%arg0: i32) -> (i32, i32) {
    %c0_i32 = arith.constant 0 : i32
    %c0_i32_0 = arith.constant 0 : i32
    %c0_i32_1 = arith.constant 0 : i32
    return %c0_i32, %c0_i32_0 : i32, i32
  }
  func.func @transform_10(%arg0: i32) -> (i32, i32, i32) {
    %c0_i32 = arith.constant 0 : i32
    %c0_i32_0 = arith.constant 0 : i32
    %c0_i32_1 = arith.constant 0 : i32
    return %arg0, %c0_i32, %c0_i32_0 : i32, i32, i32
  }
  func.func @transform_11(%arg0: i32) -> (i32, i32) {
    %c0_i32 = arith.constant 0 : i32
    %c0_i32_0 = arith.constant 0 : i32
    %c0_i32_1 = arith.constant 0 : i32
    return %c0_i32, %c0_i32_0 : i32, i32
  }
}

</mosaic_0001>

<llo_original>
// kernel: tpu_custom_call.1
$region0: #{tpu_custom_call.1}
  #allocation0 [shape = 'u32[]', space=smem, size = 0x4, offset = 0x4, fixed_abs, tag = 'smem constant byte address 0x4 - core index']
  #allocation1 [shape = 'u32[144,128]{1,0:T(1,128)}', space=vmem, size = 0x12000, scoped, tag = 'internal scratch']
  #allocation2 [shape = 'f32[4,32]{1,0:T(4,128)}', space=vmem, size = 0x800, scoped, tag = 'scratch operand']
  #allocation3 [shape = 'f32[4,32]{1,0:T(4,128)}', space=vmem, size = 0x800, scoped, tag = 'scratch operand']
  #allocation4 [shape = 'f32[4,32]{1,0:T(4,128)}', space=vmem, size = 0x800, scoped, tag = 'scratch operand']
  %s0 = inlined_call_operand.hbm [shape: f32[1,4,16], index: 0, kind: input, shape index: {}]
  %s1 = inlined_call_operand.hbm [shape: f32[4,32], index: 1, kind: input, shape index: {}]
  %s2 = inlined_call_operand.hbm [shape: f32[4,32], index: 2, kind: input, shape index: {}]
  %s3 = inlined_call_operand.hbm [shape: f32[4,32], index: 3, kind: input, shape index: {}]
  %s4 = inlined_call_operand.hbm [shape: bf16[16,128], index: 4, kind: input, shape index: {}]
  %s5 = inlined_call_operand.vmem [shape: bf16[32,128], index: 5, kind: input, shape index: {}]
  %s6 = inlined_call_operand.vmem [shape: bf16[32,128], index: 6, kind: input, shape index: {}]
  %s7 = inlined_call_operand.vmem [shape: f32[1,128], index: 7, kind: input, shape index: {}]
  %s8 = inlined_call_operand.vmem [shape: bf16[32,32], index: 8, kind: input, shape index: {}]
  %s9 = inlined_call_operand.vmem [shape: bf16[32,24], index: 9, kind: input, shape index: {}]
  %s10 = inlined_call_operand.hbm [shape: f32[1,4,128], index: 10, kind: output, shape index: {0}]
  %s11 = inlined_call_operand.hbm [shape: f32[4,128], index: 11, kind: output, shape index: {1}]
  %12 = xla_tuple %s10, %s11
  %s13 = sld [smem:[#allocation0]]
  $region86: #{tpu_custom_call.1} parent=0
    _
  %s15 = ssub.s32 1, %s13
  %s16 = scalar_select 0, %s15, %s13
  $region1: #{tpu_custom_call.1} parent=0
    #allocation5 [shape = 'u8[2048]{0}', space=vmem, size = 0x800, scoped, tag = 'input window, operand 0, single buffered']
    #allocation6 [shape = 's32[1]{0}', space=sflag, size = 0x4, scoped, tag = 'scoped memory for tpu_custom_call.1']
    #allocation7 [shape = 's32[1]{0}', space=sflag, size = 0x4, scoped, tag = 'scoped memory for tpu_custom_call.1']
    #allocation8 [shape = 'u8[2048]{0}', space=vmem, size = 0x800, scoped, tag = 'input window, operand 1, single buffered']
    #allocation9 [shape = 's32[1]{0}', space=sflag, size = 0x4, scoped, tag = 'scoped memory for tpu_custom_call.1']
    #allocation10 [shape = 'u8[2048]{0}', space=vmem, size = 0x800, scoped, tag = 'input window, operand 2, single buffered']
    #allocation11 [shape = 'u8[2048]{0}', space=vmem, size = 0x800, scoped, tag = 'input window, operand 3, single buffered']
    #allocation12 [shape = 's32[1]{0}', space=sflag, size = 0x4, scoped, tag = 'scoped memory for tpu_custom_call.1']
    #allocation13 [shape = 'u8[4096]{0}', space=vmem, size = 0x1000, scoped, tag = 'input window, operand 4, single buffered']
    #allocation14 [shape = 'u8[2048]{0}', space=vmem, size = 0x800, scoped, tag = 'output window, operand 0, single buffered']
    #allocation15 [shape = 'u8[2048]{0}', space=vmem, size = 0x800, scoped, tag = 'output window, operand 1, single buffered']
    #allocation16 [shape = 's32[1]{0}', space=sflag, size = 0x4, scoped, tag = 'scoped memory for tpu_custom_call.1']
    %17 = vsyncpa [#allocation6], 0
    %18 = vsyncpa [#allocation9], 0
    %19 = vsyncpa [#allocation12], 0
    %20 = vsyncpa [#allocation7], 0
    %21 = vsyncpa [#allocation16], 0
    // Predicated region
    $region2: #{tpu_custom_call.1} parent=1 // pred_check
      _
    $region3: #{tpu_custom_call.1} parent=1 // pred_check_branch
      %23 = sbr.rel (0) target = $region5
    $region4: #{tpu_custom_call.1} parent=1 // pred_region
      %s25 = ssub.s32 64, 64
      %26 = vsyncadd [#allocation6], %s25
      %s28 = sshll.u32 [#allocation5], 4
      %s29 = int_to_ptr.vmem [resolvable:$true] %s28
      %31 = dma.hbm_to_vmem [thread:$0]  %s0, 64, %s29, [#allocation6]
    $region5: #{tpu_custom_call.1} parent=1 // pred_fallthru
      _
    // Predicated region
    $region6: #{tpu_custom_call.1} parent=1 // pred_check
      _
    $region7: #{tpu_custom_call.1} parent=1 // pred_check_branch
      %33 = sbr.rel (0) target = $region9
    $region8: #{tpu_custom_call.1} parent=1 // pred_region
      %s35 = ssub.s32 64, 64
      %36 = vsyncadd [#allocation9], %s35
      %s38 = sshll.u32 [#allocation8], 4
      %s39 = int_to_ptr.vmem [resolvable:$true] %s38
      %41 = dma.hbm_to_vmem [thread:$0]  %s1, 64, %s39, [#allocation9]
    $region9: #{tpu_custom_call.1} parent=1 // pred_fallthru
      _
    // Predicated region
    $region10: #{tpu_custom_call.1} parent=1 // pred_check
      _
    $region11: #{tpu_custom_call.1} parent=1 // pred_check_branch
      %43 = sbr.rel (0) target = $region13
    $region12: #{tpu_custom_call.1} parent=1 // pred_region
      %s45 = ssub.s32 64, 64
      %46 = vsyncadd [#allocation9], %s45
      %s48 = sshll.u32 [#allocation10], 4
      %s49 = int_to_ptr.vmem [resolvable:$true] %s48
      %51 = dma.hbm_to_vmem [thread:$0]  %s2, 64, %s49, [#allocation9]
    $region13: #{tpu_custom_call.1} parent=1 // pred_fallthru
      _
    // Predicated region
    $region14: #{tpu_custom_call.1} parent=1 // pred_check
      _
    $region15: #{tpu_custom_call.1} parent=1 // pred_check_branch
      %53 = sbr.rel (0) target = $region17
    $region16: #{tpu_custom_call.1} parent=1 // pred_region
      %s55 = ssub.s32 64, 64
      %56 = vsyncadd [#allocation12], %s55
      %s58 = sshll.u32 [#allocation11], 4
      %s59 = int_to_ptr.vmem [resolvable:$true] %s58
      %61 = dma.hbm_to_vmem [thread:$0]  %s3, 64, %s59, [#allocation12]
    $region17: #{tpu_custom_call.1} parent=1 // pred_fallthru
      _
    // Predicated region
    $region18: #{tpu_custom_call.1} parent=1 // pred_check
      _
    $region19: #{tpu_custom_call.1} parent=1 // pred_check_branch
      %63 = sbr.rel (0) target = $region21
    $region20: #{tpu_custom_call.1} parent=1 // pred_region
      %s65 = ssub.s32 128, 128
      %66 = vsyncadd [#allocation12], %s65
      %s67 = sshll.u32 [#allocation13], 4
      %s68 = int_to_ptr.vmem [resolvable:$true] %s67
      %73 = dma.hbm_to_vmem [thread:$0]  %s4, 128, %s68, [#allocation12], 64, 64, 4
    $region21: #{tpu_custom_call.1} parent=1 // pred_fallthru
      _
    // Predicated region
    $region22: #{tpu_custom_call.1} parent=1 // pred_check
      _
    $region23: #{tpu_custom_call.1} parent=1 // pred_check_branch
      %75 = sbr.rel (0) target = $region25
    $region24: #{tpu_custom_call.1} parent=1 // pred_region
      _
    $region25: #{tpu_custom_call.1} parent=1 // pred_fallthru
      _
    // Predicated region
    $region26: #{tpu_custom_call.1} parent=1 // pred_check
      _
    $region27: #{tpu_custom_call.1} parent=1 // pred_check_branch
      %77 = sbr.rel (0) target = $region29
    $region28: #{tpu_custom_call.1} parent=1 // pred_region
      _
    $region29: #{tpu_custom_call.1} parent=1 // pred_fallthru
      _
    // Predicated region
    $region30: #{tpu_custom_call.1} parent=1 // pred_check
      _
    $region31: #{tpu_custom_call.1} parent=1 // pred_check_branch
      %79 = sbr.rel (0) target = $region33
    $region32: #{tpu_custom_call.1} parent=1 // pred_region
      _
    $region33: #{tpu_custom_call.1} parent=1 // pred_fallthru
      _
    // Predicated region
    $region34: #{tpu_custom_call.1} parent=1 // pred_check
      _
    $region35: #{tpu_custom_call.1} parent=1 // pred_check_branch
      %81 = sbr.rel (0) target = $region37
    $region36: #{tpu_custom_call.1} parent=1 // pred_region
      _
    $region37: #{tpu_custom_call.1} parent=1 // pred_fallthru
      _
    // Predicated region
    $region38: #{tpu_custom_call.1} parent=1 // pred_check
      _
    $region39: #{tpu_custom_call.1} parent=1 // pred_check_branch
      %83 = sbr.rel (0) target = $region41
    $region40: #{tpu_custom_call.1} parent=1 // pred_region
      _
    $region41: #{tpu_custom_call.1} parent=1 // pred_fallthru
      _
    // Predicated region
    $region42: #{tpu_custom_call.1} parent=1 // pred_check
      _
    $region43: #{tpu_custom_call.1} parent=1 // pred_check_branch
      %85 = sbr.rel (0) target = $region45
    $region44: #{tpu_custom_call.1} parent=1 // pred_region
      %86 = dma.done [#allocation6], 64
    $region45: #{tpu_custom_call.1} parent=1 // pred_fallthru
      _
    // Predicated region
    $region46: #{tpu_custom_call.1} parent=1 // pred_check
      _
    $region47: #{tpu_custom_call.1} parent=1 // pred_check_branch
      %88 = sbr.rel (0) target = $region49
    $region48: #{tpu_custom_call.1} parent=1 // pred_region
      %89 = dma.done [#allocation9], 64
    $region49: #{tpu_custom_call.1} parent=1 // pred_fallthru
      _
    // Predicated region
    $region50: #{tpu_custom_call.1} parent=1 // pred_check
      _
    $region51: #{tpu_custom_call.1} parent=1 // pred_check_branch
      %91 = sbr.rel (0) target = $region53
    $region52: #{tpu_custom_call.1} parent=1 // pred_region
      %92 = dma.done [#allocation9], 64
    $region53: #{tpu_custom_call.1} parent=1 // pred_fallthru
      _
    // Predicated region
    $region54: #{tpu_custom_call.1} parent=1 // pred_check
      _
    $region55: #{tpu_custom_call.1} parent=1 // pred_check_branch
      %94 = sbr.rel (0) target = $region57
    $region56: #{tpu_custom_call.1} parent=1 // pred_region
      %95 = dma.done [#allocation12], 64
    $region57: #{tpu_custom_call.1} parent=1 // pred_fallthru
      _
    // Predicated region
    $region58: #{tpu_custom_call.1} parent=1 // pred_check
      _
    $region59: #{tpu_custom_call.1} parent=1 // pred_check_branch
      %97 = sbr.rel (0) target = $region61
    $region60: #{tpu_custom_call.1} parent=1 // pred_region
      %98 = dma.done [#allocation12], 128
    $region61: #{tpu_custom_call.1} parent=1 // pred_fallthru
      _
    %p100 = scmp.eq.s32.totalorder 0, 0
    // Predicated region
    $region62: #{tpu_custom_call.1} parent=1 // pred_check
      %p101 = pneg %p100
    $region63: #{tpu_custom_call.1} parent=1 // pred_check_branch
      %103 = sbr.rel (%p101) target = $region65
    $region64: #{tpu_custom_call.1} parent=1 // pred_region
      %v104 = vld [vmem:[#allocation8] sm:$0xf]
      %vm105 = vcmask 257024
      %106 = vst.msk [vmem:[#allocation2] sm:$0xf] %vm105, %v104
      %v107 = vld [vmem:[#allocation10] sm:$0xf]
      %108 = vst.msk [vmem:[#allocation3] sm:$0xf] %vm105, %v107
      %v109 = vld [vmem:[#allocation11] sm:$0xf]
      %110 = vst.msk [vmem:[#allocation4] sm:$0xf] %vm105, %v109
    $region65: #{tpu_custom_call.1} parent=1 // pred_fallthru
      _
    %v111 = vld [vmem:[#allocation2] sm:$0xf]
    %v112 = vld [vmem:[#allocation3] sm:$0xf]
    %v113 = vld [vmem:[#allocation4] sm:$0xf]
    %v114 = vld [vmem:[#allocation5] sm:$0xf]
    %v115 = vpack.c.bf16 %v114, %v114
    %v116 = vld [vmem:[#allocation13] sm:$0xf]
    %v117 = vld [vmem:[#allocation13 + $0x4] sm:$0xf]
    %v118 = vpack.c.bf16 %v113, %v113
    %v119 = vld [vmem:[%s5] sm:$0xf]
    %v120 = vld [vmem:[%s5 + $0x4] sm:$0xf]
    %v121 = vld [vmem:[%s5 + $0x8] sm:$0xf]
    %v122 = vld [vmem:[%s5 + $0xc] sm:$0xf]
    %v127 = vunpack.c.l.b16 %v119
    %v128 = vunpack.c.l.b16 %v120
    %v129 = vunpack.c.l.b16 %v121
    %v130 = vunpack.c.l.b16 %v122
    %v131 = vpack.c.b16 %v128, %v127
    %v132 = vpack.c.b16 %v130, %v129
    %vm135 = vcmask 261120
    %v137 = vsel %vm135, %v118, 0
    %139 = vmatprep.subr.bf16.mxu0 0
    %140 = vmatpush1.bf16.msra.mxu0 %v131
    %141 = vmatprep.subr.bf16.mxu0 0
    %142 = vmatpush1.bf16.msra.mxu0 %v132
    %143 = vmatprep.subr.bf16.mxu0 0
    %144 = vmatpush1.bf16.msra.mxu0 0
    %145 = vmatprep.subr.bf16.mxu0 0
    %146 = vmatpush1.bf16.msra.mxu0 0
    %147 = vmatprep.subr.bf16.mxu0 0
    %148 = vmatpush1.bf16.msra.mxu0 0
    %149 = vmatprep.subr.bf16.mxu0 0
    %150 = vmatpush1.bf16.msra.mxu0 0
    %151 = vmatprep.subr.bf16.mxu0 0
    %152 = vmatpush1.bf16.msra.mxu0 0
    %153 = vmatprep.subr.bf16.mxu0 0
    %154 = vmatpush1.bf16.msra.mxu0 0
    %155 = vmatprep.subr.bf16.mxu0 0
    %156 = vmatpush1.bf16.msra.mxu0 0
    %157 = vmatprep.subr.bf16.mxu0 0
    %158 = vmatpush1.bf16.msra.mxu0 0
    %159 = vmatprep.subr.bf16.mxu0 0
    %160 = vmatpush1.bf16.msra.mxu0 0
    %161 = vmatprep.subr.bf16.mxu0 0
    %162 = vmatpush1.bf16.msra.mxu0 0
    %163 = vmatprep.subr.bf16.mxu0 0
    %164 = vmatpush1.bf16.msra.mxu0 0
    %165 = vmatprep.subr.bf16.mxu0 0
    %166 = vmatpush1.bf16.msra.mxu0 0
    %167 = vmatprep.subr.bf16.mxu0 0
    %168 = vmatpush1.bf16.msra.mxu0 0
    %169 = vmatprep.subr.bf16.mxu0 0
    %170 = vmatpush1.bf16.msra.mxu0 0
    %171 = vmatprep.mubr.bf16.mxu0 0
    %172 = vmatmul.mubr.bf16.gmra.mrb[0].mxu0 %v137
    %v173 = vpop.f32.mrb[0].mxu0
    %v174 = vadd.f32 0.0, %v173
    %v175 = vpop.f32.mrb[0].mxu0
    %v176 = vpop.f32.mrb[0].mxu0
    %v177 = vpop.f32.mrb[0].mxu0
    %178 = vdwg.mxu0
    %v181 = vunpack.c.l.b16 %v116
    %v182 = vunpack.c.l.b16 %v117
    %v183 = vpack.c.b16 %v182, %v181
    %vm185 = vcmask 130048
    %v187 = vsel %vm185, %v115, 0
    %189 = vmatprep.subr.bf16.mxu0 0
    %190 = vmatpush1.bf16.msra.mxu0 %v183
    %191 = vmatprep.subr.bf16.mxu0 0
    %192 = vmatpush1.bf16.msra.mxu0 0
    %193 = vmatprep.subr.bf16.mxu0 0
    %194 = vmatpush1.bf16.msra.mxu0 0
    %195 = vmatprep.subr.bf16.mxu0 0
    %196 = vmatpush1.bf16.msra.mxu0 0
    %197 = vmatprep.subr.bf16.mxu0 0
    %198 = vmatpush1.bf16.msra.mxu0 0
    %199 = vmatprep.subr.bf16.mxu0 0
    %200 = vmatpush1.bf16.msra.mxu0 0
    %201 = vmatprep.subr.bf16.mxu0 0
    %202 = vmatpush1.bf16.msra.mxu0 0
    %203 = vmatprep.subr.bf16.mxu0 0
    %204 = vmatpush1.bf16.msra.mxu0 0
    %205 = vmatprep.subr.bf16.mxu0 0
    %206 = vmatpush1.bf16.msra.mxu0 0
    %207 = vmatprep.subr.bf16.mxu0 0
    %208 = vmatpush1.bf16.msra.mxu0 0
    %209 = vmatprep.subr.bf16.mxu0 0
    %210 = vmatpush1.bf16.msra.mxu0 0
    %211 = vmatprep.subr.bf16.mxu0 0
    %212 = vmatpush1.bf16.msra.mxu0 0
    %213 = vmatprep.subr.bf16.mxu0 0
    %214 = vmatpush1.bf16.msra.mxu0 0
    %215 = vmatprep.subr.bf16.mxu0 0
    %216 = vmatpush1.bf16.msra.mxu0 0
    %217 = vmatprep.subr.bf16.mxu0 0
    %218 = vmatpush1.bf16.msra.mxu0 0
    %219 = vmatprep.subr.bf16.mxu0 0
    %220 = vmatpush1.bf16.msra.mxu0 0
    %221 = vmatprep.mubr.bf16.mxu0 0
    %222 = vmatmul.mubr.bf16.gmra.mrb[0].mxu0 %v187
    %v223 = vpop.f32.mrb[0].mxu0
    %v224 = vadd.f32 %v174, %v223
    %v225 = vpop.f32.mrb[0].mxu0
    %v226 = vpop.f32.mrb[0].mxu0
    %v227 = vpop.f32.mrb[0].mxu0
    %228 = vdwg.mxu0
    %v229 = vpack.c.bf16 %v111, %v111
    %v230 = vld [vmem:[%s6] sm:$0xf]
    %v231 = vld [vmem:[%s6 + $0x4] sm:$0xf]
    %v232 = vld [vmem:[%s6 + $0x8] sm:$0xf]
    %v233 = vld [vmem:[%s6 + $0xc] sm:$0xf]
    %v238 = vunpack.c.l.b16 %v230
    %v239 = vunpack.c.l.b16 %v231
    %v240 = vunpack.c.l.b16 %v232
    %v241 = vunpack.c.l.b16 %v233
    %v242 = vpack.c.b16 %v239, %v238
    %v243 = vpack.c.b16 %v241, %v240
    %v247 = vsel %vm135, %v229, 0
    %249 = vmatprep.subr.bf16.mxu0 0
    %250 = vmatpush1.bf16.msra.mxu0 %v242
    %251 = vmatprep.subr.bf16.mxu0 0
    %252 = vmatpush1.bf16.msra.mxu0 %v243
    %253 = vmatprep.subr.bf16.mxu0 0
    %254 = vmatpush1.bf16.msra.mxu0 0
    %255 = vmatprep.subr.bf16.mxu0 0
    %256 = vmatpush1.bf16.msra.mxu0 0
    %257 = vmatprep.subr.bf16.mxu0 0
    %258 = vmatpush1.bf16.msra.mxu0 0
    %259 = vmatprep.subr.bf16.mxu0 0
    %260 = vmatpush1.bf16.msra.mxu0 0
    %261 = vmatprep.subr.bf16.mxu0 0
    %262 = vmatpush1.bf16.msra.mxu0 0
    %263 = vmatprep.subr.bf16.mxu0 0
    %264 = vmatpush1.bf16.msra.mxu0 0
    %265 = vmatprep.subr.bf16.mxu0 0
    %266 = vmatpush1.bf16.msra.mxu0 0
    %267 = vmatprep.subr.bf16.mxu0 0
    %268 = vmatpush1.bf16.msra.mxu0 0
    %269 = vmatprep.subr.bf16.mxu0 0
    %270 = vmatpush1.bf16.msra.mxu0 0
    %271 = vmatprep.subr.bf16.mxu0 0
    %272 = vmatpush1.bf16.msra.mxu0 0
    %273 = vmatprep.subr.bf16.mxu0 0
    %274 = vmatpush1.bf16.msra.mxu0 0
    %275 = vmatprep.subr.bf16.mxu0 0
    %276 = vmatpush1.bf16.msra.mxu0 0
    %277 = vmatprep.subr.bf16.mxu0 0
    %278 = vmatpush1.bf16.msra.mxu0 0
    %279 = vmatprep.subr.bf16.mxu0 0
    %280 = vmatpush1.bf16.msra.mxu0 0
    %281 = vmatprep.mubr.bf16.mxu0 0
    %282 = vmatmul.mubr.bf16.gmra.mrb[0].mxu0 %v247
    %v283 = vpop.f32.mrb[0].mxu0
    %v284 = vadd.f32 0.0, %v283
    %v285 = vpop.f32.mrb[0].mxu0
    %v286 = vpop.f32.mrb[0].mxu0
    %v287 = vpop.f32.mrb[0].mxu0
    %288 = vdwg.mxu0
    %v289 = vadd.f32 %v224, %v284
    %v290 = vld [vmem:[%s7] sm:$0x1]
    %v292 = vlaneseq
    %v293 = vshrl.u32 %v292, 7
    %v294 = vsub.s32 0, %v293
    %v295 = vrot.slane %v290, %v294
    %v297 = vadd.f32 %v289, %v295
    %v298 = vxor.u32 %v297, 2147483648
    %v299 = vmul.f32 %v298, 1.442695
    %v300 = vpow.pop %v299
    %v301 = vadd.f32 %v300, 1.0
    %v302 = vrcp.pop %v301
    %v303 = vmul.f32 1.0, %v302
    %v304 = vtanh.pop %v297
    %306 = vrot.lane.b32.xlu0 %v112, 32
    %v307 = vpop.permute.xlu0 %306
    %v309 = vmul.f32 %v303, %v307
    %311 = vrot.lane.b32.xlu0 %v304, 64
    %v312 = vpop.permute.xlu0 %311
    %v314 = vmul.f32 %v303, %v312
    %316 = vrot.lane.b32.xlu0 %v314, 32
    %v317 = vpop.permute.xlu0 %316
    %v319 = vadd.f32 %v309, %v317
    %v320 = vtanh.pop %v319
    %322 = vrot.lane.b32.xlu0 %v320, 64
    %v323 = vpop.permute.xlu0 %322
    %v325 = vmul.f32 %v303, %v323
    %v326 = vpack.c.bf16 %v325, %v325
    %v327 = vld [vmem:[%s8] sm:$0xf]
    %v328 = vld [vmem:[%s8 + $0x4] sm:$0xf]
    %v329 = vld [vmem:[%s8 + $0x8] sm:$0xf]
    %v330 = vld [vmem:[%s8 + $0xc] sm:$0xf]
    %332 = vrot.lane.b32.xlu0 %v326, 32
    %v333 = vpop.permute.xlu0 %332
    %v338 = vunpack.c.l.b16 %v327
    %v339 = vunpack.c.l.b16 %v328
    %v340 = vunpack.c.l.b16 %v329
    %v341 = vunpack.c.l.b16 %v330
    %v342 = vpack.c.b16 %v339, %v338
    %v343 = vpack.c.b16 %v341, %v340
    %v347 = vsel %vm135, %v333, 0
    %349 = vmatprep.subr.bf16.mxu0 0
    %350 = vmatpush1.bf16.msra.mxu0 %v342
    %351 = vmatprep.subr.bf16.mxu0 0
    %352 = vmatpush1.bf16.msra.mxu0 %v343
    %353 = vmatprep.subr.bf16.mxu0 0
    %354 = vmatpush1.bf16.msra.mxu0 0
    %355 = vmatprep.subr.bf16.mxu0 0
    %356 = vmatpush1.bf16.msra.mxu0 0
    %357 = vmatprep.subr.bf16.mxu0 0
    %358 = vmatpush1.bf16.msra.mxu0 0
    %359 = vmatprep.subr.bf16.mxu0 0
    %360 = vmatpush1.bf16.msra.mxu0 0
    %361 = vmatprep.subr.bf16.mxu0 0
    %362 = vmatpush1.bf16.msra.mxu0 0
    %363 = vmatprep.subr.bf16.mxu0 0
    %364 = vmatpush1.bf16.msra.mxu0 0
    %365 = vmatprep.subr.bf16.mxu0 0
    %366 = vmatpush1.bf16.msra.mxu0 0
    %367 = vmatprep.subr.bf16.mxu0 0
    %368 = vmatpush1.bf16.msra.mxu0 0
    %369 = vmatprep.subr.bf16.mxu0 0
    %370 = vmatpush1.bf16.msra.mxu0 0
    %371 = vmatprep.subr.bf16.mxu0 0
    %372 = vmatpush1.bf16.msra.mxu0 0
    %373 = vmatprep.subr.bf16.mxu0 0
    %374 = vmatpush1.bf16.msra.mxu0 0
    %375 = vmatprep.subr.bf16.mxu0 0
    %376 = vmatpush1.bf16.msra.mxu0 0
    %377 = vmatprep.subr.bf16.mxu0 0
    %378 = vmatpush1.bf16.msra.mxu0 0
    %379 = vmatprep.subr.bf16.mxu0 0
    %380 = vmatpush1.bf16.msra.mxu0 0
    %381 = vmatprep.mubr.bf16.mxu0 0
    %382 = vmatmul.mubr.bf16.gmra.mrb[0].mxu0 %v347
    %v383 = vpop.f32.mrb[0].mxu0
    %v384 = vadd.f32 0.0, %v383
    %v385 = vpop.f32.mrb[0].mxu0
    %v386 = vpop.f32.mrb[0].mxu0
    %v387 = vpop.f32.mrb[0].mxu0
    %388 = vdwg.mxu0
    %v389 = vtanh.pop %v384
    %v390 = vpack.c.bf16 %v389, %v389
    %v391 = vld [vmem:[%s9] sm:$0xf]
    %v392 = vld [vmem:[%s9 + $0x4] sm:$0xf]
    %v393 = vld [vmem:[%s9 + $0x8] sm:$0xf]
    %v394 = vld [vmem:[%s9 + $0xc] sm:$0xf]
    %v399 = vunpack.c.l.b16 %v391
    %v400 = vunpack.c.l.b16 %v392
    %v401 = vunpack.c.l.b16 %v393
    %v402 = vunpack.c.l.b16 %v394
    %v403 = vpack.c.b16 %v400, %v399
    %v404 = vpack.c.b16 %v402, %v401
    %v408 = vsel %vm135, %v390, 0
    %410 = vmatprep.subr.bf16.mxu0 0
    %411 = vmatpush1.bf16.msra.mxu0 %v403
    %412 = vmatprep.subr.bf16.mxu0 0
    %413 = vmatpush1.bf16.msra.mxu0 %v404
    %414 = vmatprep.subr.bf16.mxu0 0
    %415 = vmatpush1.bf16.msra.mxu0 0
    %416 = vmatprep.subr.bf16.mxu0 0
    %417 = vmatpush1.bf16.msra.mxu0 0
    %418 = vmatprep.subr.bf16.mxu0 0
    %419 = vmatpush1.bf16.msra.mxu0 0
    %420 = vmatprep.subr.bf16.mxu0 0
    %421 = vmatpush1.bf16.msra.mxu0 0
    %422 = vmatprep.subr.bf16.mxu0 0
    %423 = vmatpush1.bf16.msra.mxu0 0
    %424 = vmatprep.subr.bf16.mxu0 0
    %425 = vmatpush1.bf16.msra.mxu0 0
    %426 = vmatprep.subr.bf16.mxu0 0
    %427 = vmatpush1.bf16.msra.mxu0 0
    %428 = vmatprep.subr.bf16.mxu0 0
    %429 = vmatpush1.bf16.msra.mxu0 0
    %430 = vmatprep.subr.bf16.mxu0 0
    %431 = vmatpush1.bf16.msra.mxu0 0
    %432 = vmatprep.subr.bf16.mxu0 0
    %433 = vmatpush1.bf16.msra.mxu0 0
    %434 = vmatprep.subr.bf16.mxu0 0
    %435 = vmatpush1.bf16.msra.mxu0 0
    %436 = vmatprep.subr.bf16.mxu0 0
    %437 = vmatpush1.bf16.msra.mxu0 0
    %438 = vmatprep.subr.bf16.mxu0 0
    %439 = vmatpush1.bf16.msra.mxu0 0
    %440 = vmatprep.subr.bf16.mxu0 0
    %441 = vmatpush1.bf16.msra.mxu0 0
    %442 = vmatprep.mubr.bf16.mxu0 0
    %443 = vmatmul.mubr.bf16.gmra.mrb[0].mxu0 %v408
    %v444 = vpop.f32.mrb[0].mxu0
    %v445 = vadd.f32 0.0, %v444
    %v446 = vpop.f32.mrb[0].mxu0
    %v447 = vpop.f32.mrb[0].mxu0
    %v448 = vpop.f32.mrb[0].mxu0
    %449 = vdwg.mxu0
    %vm450 = vcmask 191488
    %v451 = vsel %vm450, %v445, -inf
    %452 = vmax.xlane.f32.xlu0 %v451
    %v453 = vpop.xlane.xlu0 %452
    %v454 = vsub.f32 %v445, %v453
    %v455 = vmul.f32 %v454, 1.442695
    %v456 = vpow.pop %v455
    %v457 = vsel %vm450, %v456, 0.0
    %458 = vadd.xlane.f32.xlu0 %v457
    %v459 = vpop.xlane.xlu0 %458
    %v460 = vlog2.pop %v459
    %v461 = vmul.f32 %v460, 0.6931472
    %v462 = vadd.f32 %v461, %v453
    %v463 = vsub.f32 %v445, %v462
    %vm464 = vcmask 195584
    %v465 = vsel %vm464, %v463, 0.0
    %466 = vst [vmem:[#allocation14] sm:$0xf] %v465
    %468 = vrot.lane.b32.xlu0 %v325, 32
    %v469 = vpop.permute.xlu0 %468
    %vm471 = vcmask 257024
    %472 = vst.msk [vmem:[#allocation2] sm:$0xf] %vm471, %v469
    %474 = vrot.lane.b32.xlu0 %v319, 96
    %v475 = vpop.permute.xlu0 %474
    %477 = vst.msk [vmem:[#allocation3] sm:$0xf] %vm471, %v475
    %478 = vst.msk [vmem:[#allocation4] sm:$0xf] %vm471, %v389
    // Predicated region
    $region66: #{tpu_custom_call.1} parent=1 // pred_check
      %p479 = pneg %p100
    $region67: #{tpu_custom_call.1} parent=1 // pred_check_branch
      %481 = sbr.rel (%p479) target = $region69
    $region68: #{tpu_custom_call.1} parent=1 // pred_region
      %483 = vrot.lane.b32.xlu0 %v389, 64
      %v484 = vpop.permute.xlu0 %483
      %v486 = vsel %vm135, %v469, %v319
      %vm487 = vcmask 523264
      %v488 = vsel %vm487, %v486, %v484
      %vm489 = vcmask 785408
      %v490 = vsel %vm489, %v488, 0.0
      %491 = vst [vmem:[#allocation15] sm:$0xf] %v490
    $region69: #{tpu_custom_call.1} parent=1 // pred_fallthru
      _
    // Predicated region
    $region70: #{tpu_custom_call.1} parent=1 // pred_check
      _
    $region71: #{tpu_custom_call.1} parent=1 // pred_check_branch
      %493 = sbr.rel (0) target = $region73
    $region72: #{tpu_custom_call.1} parent=1 // pred_region
      %s495 = ssub.s32 64, 64
      %496 = vsyncadd [#allocation7], %s495
      %s498 = sshll.u32 [#allocation14], 4
      %s499 = int_to_ptr.vmem [resolvable:$true] %s498
      %501 = dma.vmem_to_hbm [thread:$0]  %s499, 64, %s10, [#allocation7]
    $region73: #{tpu_custom_call.1} parent=1 // pred_fallthru
      _
    // Predicated region
    $region74: #{tpu_custom_call.1} parent=1 // pred_check
      _
    $region75: #{tpu_custom_call.1} parent=1 // pred_check_branch
      %503 = sbr.rel (0) target = $region77
    $region76: #{tpu_custom_call.1} parent=1 // pred_region
      %s505 = ssub.s32 64, 64
      %506 = vsyncadd [#allocation16], %s505
      %s508 = sshll.u32 [#allocation15], 4
      %s509 = int_to_ptr.vmem [resolvable:$true] %s508
      %511 = dma.vmem_to_hbm [thread:$0]  %s509, 64, %s11, [#allocation16]
    $region77: #{tpu_custom_call.1} parent=1 // pred_fallthru
      _
    // Predicated region
    $region78: #{tpu_custom_call.1} parent=1 // pred_check
      _
    $region79: #{tpu_custom_call.1} parent=1 // pred_check_branch
      %513 = sbr.rel (0) target = $region81
    $region80: #{tpu_custom_call.1} parent=1 // pred_region
      %514 = dma.done [#allocation7], 64
    $region81: #{tpu_custom_call.1} parent=1 // pred_fallthru
      _
    // Predicated region
    $region82: #{tpu_custom_call.1} parent=1 // pred_check
      _
    $region83: #{tpu_custom_call.1} parent=1 // pred_check_branch
      %516 = sbr.rel (0) target = $region85
    $region84: #{tpu_custom_call.1} parent=1 // pred_region
      %517 = dma.done [#allocation16], 64
    $region85: #{tpu_custom_call.1} parent=1 // pred_fallthru
      _
    %518 = vsyncpa [#allocation6], 1
    %519 = vsyncpa [#allocation9], 1
    %520 = vsyncpa [#allocation12], 1
    %521 = vsyncpa [#allocation7], 1
    %522 = vsyncpa [#allocation16], 1

</llo_original>
